<compile_context>
chip_gen: v7x
topology: tpu7x:2x2x1
jax: 0.10.0
libtpu: 0.0.40
codegen_flags: <defaults>
</compile_context>

<pallas_src>
import functools

import jax
import jax.numpy as jnp
from jax.experimental import pallas as pl
from jax.experimental.pallas import tpu as pltpu

EPS = 1e-5

# dot_general dimension numbers contracting the last dim of both operands
# (the "NT" / q @ k^T pattern): (1,H) x (TB,H) -> (1,TB).
_NT_DIMS = (((1,), (1,)), ((), ()))


def lm_kernel(x_ref, w1_ref, b1_ref, w2_ref, b2_ref, out_ref):
    """One batch tile.

    x_ref : (TB, F)    streamed input rows (f32 or bf16)
    w1_ref: (F, Hp)    BN1-folded fc1 weight, hidden dim zero-padded to Hp
    b1_ref: (1, Hp)    BN1-folded fc1 bias (zero in padded columns)
    w2_ref: (8, Hp)    BN2-folded fc2 weight row, replicated over 8 sublanes
    b2_ref: (1, 1)     BN2-folded fc2 bias
    out_ref:(1, 1, TB) lane-dense sigmoid output (batch on lanes)
    """
    # fc1 (BN1 already folded into w1/b1).  bf16 x is promoted in-VMEM; the MXU
    # accumulates in f32 via preferred_element_type.
    h = jnp.dot(x_ref[...], w1_ref[...], preferred_element_type=jnp.float32)
    h = jnp.maximum(h + b1_ref[...], 0.0)                       # (TB, Hp), ReLU

    # Dropout: identity in eval mode.

    # fc2 (BN2 folded into w2/b2) as an NT matmul so the batch dim lands on
    # lanes: (8, Hp) . (TB, Hp)^T -> (8, TB); keep row 0.
    o = jax.lax.dot_general(w2_ref[...], h, _NT_DIMS,
                            preferred_element_type=jnp.float32)  # (8, TB)
    o = o[0:1, :] + b2_ref[...]                                  # (1, TB)

    out_ref[0] = jax.nn.sigmoid(o).astype(out_ref.dtype)         # (1, TB) store


def _round_up(n, m):
    return ((n + m - 1) // m) * m


def _fold_batchnorms(params, h_pad):
    """Fold eval-mode BN1 / BN2 (per-channel affines) into the Linears and pad
    the hidden dim to h_pad lanes with zeros."""
    # BN1(x) = x * s1 + c1
    s1 = params["bn1_gamma"] * jax.lax.rsqrt(params["bn1_var"] + EPS)    # (1, F)
    c1 = params["bn1_beta"] - params["bn1_mean"] * s1                    # (1, F)
    w1 = params["w1"] * s1.T                                             # (F, H)
    b1 = params["b1"] + c1 @ params["w1"]                                # (1, H)

    # BN2(h) = h * s2 + c2   (applied after ReLU, so it folds into fc2)
    s2 = params["bn2_gamma"] * jax.lax.rsqrt(params["bn2_var"] + EPS)    # (1, H)
    c2 = params["bn2_beta"] - params["bn2_mean"] * s2                    # (1, H)
    w2 = params["w2"] * s2.T                                             # (H, 1)
    b2 = params["b2"] + c2 @ params["w2"]                                # (1, 1)

    h = w1.shape[1]
    pad = h_pad - h
    w1p = jnp.pad(w1, ((0, 0), (0, pad)))                                # (F, Hp)
    b1p = jnp.pad(b1, ((0, 0), (0, pad)))                                # (1, Hp)
    w2p = jnp.pad(w2.T, ((0, 0), (0, pad)))                              # (1, Hp)
    w2p = jnp.tile(w2p, (8, 1))                                          # (8, Hp)
    return w1p, b1p, w2p, b2


@functools.partial(jax.jit, static_argnames=("block_b",))
def lm_model_forward(x, params, *, block_b=4096):
    """x: (B, F) float32 or bfloat16; params: dict of eval-mode LM_model params."""
    assert x.ndim == 2
    B, F = x.shape
    H = params["w1"].shape[1]
    Hp = max(128, _round_up(H, 128))
    w1, b1, w2, b2 = _fold_batchnorms(params, Hp)

    # --- batch tile selection -------------------------------------------------
    itemsize = jnp.dtype(x.dtype).itemsize
    sub = 8 * max(1, 4 // itemsize)          # sublane multiple: f32->8, bf16->16
    # VMEM budget per row: double-buffered x tile (lane-padded to 128 lanes)
    # plus the (tb, Hp) f32 intermediate; keep the total around ~12 MiB so it
    # fits every generation's scoped-VMEM limit with headroom.
    bytes_per_row = 2 * 128 * itemsize + Hp * 4 + 64
    max_tb = max(512, ((12 << 20) // bytes_per_row) // 128 * 128)
    tb = min(_round_up(block_b, 128), max_tb, _round_up(B, sub))
    tb = max(tb, sub)

    num_tiles = pl.cdiv(B, tb)               # partial last block handled by Pallas
    grid = (num_tiles,)

    cost = pl.CostEstimate(
        flops=2 * B * F * Hp + 2 * B * Hp + 2 * B,
        transcendentals=B,                                   # sigmoid exp per row
        bytes_accessed=B * F * itemsize + B * 4 + (F * Hp + 10 * Hp + 1) * 4,
    )

    out = pl.pallas_call(
        lm_kernel,
        out_shape=jax.ShapeDtypeStruct((num_tiles, 1, tb), jnp.float32),
        grid_spec=pltpu.PrefetchScalarGridSpec(
            num_scalar_prefetch=0,
            grid=grid,
            in_specs=[
                pl.BlockSpec((tb, F), lambda i: (i, 0)),     # streamed batch tile
                pl.BlockSpec((F, Hp), lambda i: (0, 0)),     # weights stay resident
                pl.BlockSpec((1, Hp), lambda i: (0, 0)),
                pl.BlockSpec((8, Hp), lambda i: (0, 0)),
                pl.BlockSpec((1, 1), lambda i: (0, 0)),
            ],
            out_specs=pl.BlockSpec((1, 1, tb), lambda i: (i, 0, 0)),  # lane-dense
        ),
        compiler_params=pltpu.CompilerParams(
            dimension_semantics=("parallel",),
            vmem_limit_bytes=32 * 1024 * 1024,
        ),
        cost_estimate=cost,
    )(x, w1, b1, w2, b2)

    # Drop padded / garbage trailing rows (no cross-row ops happened in-kernel).
    return out.reshape(num_tiles * tb)[:B].reshape(B, 1)


def make_params(num_str_vars, key):
    """Deterministic synthetic parameters matching LM_model.__init__ shapes."""
    F = num_str_vars
    H = num_str_vars // 3
    k1, k2, k3, k4, k5, k6, k7, k8, k9, k10 = jax.random.split(key, 10)

    # PyTorch Linear weight is (out, in); pre-transposed to (in, out) here.
    w1 = jax.random.normal(k1, (H, F), jnp.float32) * 0.1
    b1 = jax.random.normal(k2, (H,), jnp.float32) * 0.01
    w2 = jax.random.normal(k3, (1, H), jnp.float32) * 0.1
    b2 = jax.random.normal(k4, (1,), jnp.float32) * 0.01

    params = dict(
        # BatchNorm1d(F), eval mode: non-trivial affine + running stats.
        bn1_gamma=1.0 + 0.1 * jax.random.normal(k5, (1, F), jnp.float32),
        bn1_beta=0.05 * jax.random.normal(k6, (1, F), jnp.float32),
        bn1_mean=0.05 * jax.random.normal(k7, (1, F), jnp.float32),
        bn1_var=jnp.ones((1, F), jnp.float32) + 0.1 * jax.random.uniform(k8, (1, F)),
        # BatchNorm1d(F // 3)
        bn2_gamma=1.0 + 0.1 * jax.random.normal(k9, (1, H), jnp.float32),
        bn2_beta=0.05 * jax.random.normal(k10, (1, H), jnp.float32),
        bn2_mean=jnp.zeros((1, H), jnp.float32),
        bn2_var=jnp.ones((1, H), jnp.float32),
        # Linears (stored pre-transposed: (in, out)), biases as (1, out).
        w1=w1.T,                        # (F, H)
        b1=b1.reshape(1, H),
        w2=w2.T,                        # (H, 1)
        b2=b2.reshape(1, 1),
    )
    return params


def reference_forward(x, params):
    """Pure-JAX reference mirroring the PyTorch eval-mode forward (unfolded BN)."""
    h = (x - params["bn1_mean"]) / jnp.sqrt(params["bn1_var"] + EPS)
    h = h * params["bn1_gamma"] + params["bn1_beta"]
    h = h @ params["w1"] + params["b1"]
    h = jnp.maximum(h, 0.0)
    h = (h - params["bn2_mean"]) / jnp.sqrt(params["bn2_var"] + EPS)
    h = h * params["bn2_gamma"] + params["bn2_beta"]
    h = h @ params["w2"] + params["b2"]
    return jax.nn.sigmoid(h)


if __name__ == "__main__":
    num_str_vars = 24          # F ; hidden = F // 3 = 8
    key = jax.random.PRNGKey(0)
    kx, kp, kx2 = jax.random.split(key, 3)
    params = make_params(num_str_vars, kp)

    # 1) Small-shape check (single tile).
    x = jax.random.normal(kx, (8, num_str_vars), jnp.float32)
    out = jax.block_until_ready(lm_model_forward(x, params))
    ref = reference_forward(x, params)
    assert out.shape == (8, 1), out.shape
    assert jnp.allclose(out, ref, atol=1e-5, rtol=1e-5), (out, ref)

    # 2) Multi-tile with a partial last block (no host-side padding copy).
    x2 = jax.random.normal(kx2, (600, num_str_vars), jnp.float32)
    out2 = jax.block_until_ready(lm_model_forward(x2, params, block_b=256))
    ref2 = reference_forward(x2, params)
    assert out2.shape == (600, 1), out2.shape
    assert jnp.allclose(out2, ref2, atol=1e-5, rtol=1e-5)

    # 3) bf16-streamed input (halves HBM read traffic); f32 accumulation.
    x3 = x2.astype(jnp.bfloat16)
    out3 = jax.block_until_ready(lm_model_forward(x3, params, block_b=256))
    ref3 = reference_forward(x3.astype(jnp.float32), params)
    assert jnp.allclose(out3, ref3, atol=2e-2, rtol=2e-2)

    print("KERNEL_OK")
</pallas_src>

<mosaic_0001>
module attributes {stable_mosaic.version = 11 : i64} {
  func.func @lm_kernel(%arg0: i32, %arg1: memref<8x24xf32, #tpu.memory_space<vmem>>, %arg2: memref<24x128xf32, #tpu.memory_space<vmem>>, %arg3: memref<1x128xf32, #tpu.memory_space<vmem>>, %arg4: memref<8x128xf32, #tpu.memory_space<vmem>>, %arg5: memref<1x1xf32, #tpu.memory_space<vmem>>, %arg6: memref<1x1x8xf32, #tpu.memory_space<vmem>>) attributes {dimension_semantics = [#tpu.dimension_semantics<parallel>], iteration_bounds = array<i64: 1>, scalar_prefetch = 0 : i64, scratch_operands = 0 : i64, tpu.core_type = #tpu.core_type<tc>, window_params = [{transform_indices = @transform_0, window_bounds = array<i64: 8, 24>}, {pipeline_mode = #tpu.pipeline_mode<synchronous>, transform_indices = @transform_1, window_bounds = array<i64: 24, 128>}, {pipeline_mode = #tpu.pipeline_mode<synchronous>, transform_indices = @transform_2, window_bounds = array<i64: 1, 128>}, {pipeline_mode = #tpu.pipeline_mode<synchronous>, transform_indices = @transform_3, window_bounds = array<i64: 8, 128>}, {pipeline_mode = #tpu.pipeline_mode<synchronous>, transform_indices = @transform_4, window_bounds = array<i64: 1, 1>}, {transform_indices = @transform_5, window_bounds = array<i64: 1, 1, 8>}]} {
    %c0 = arith.constant 0 : index
    %c0_0 = arith.constant 0 : index
    %0 = vector.load %arg1[%c0, %c0_0] : memref<8x24xf32, #tpu.memory_space<vmem>>, vector<8x24xf32>
    %c0_1 = arith.constant 0 : index
    %c0_2 = arith.constant 0 : index
    %1 = vector.load %arg2[%c0_1, %c0_2] : memref<24x128xf32, #tpu.memory_space<vmem>>, vector<24x128xf32>
    %cst = arith.constant dense<0.000000e+00> : vector<8x128xf32>
    %2 = tpu.matmul %0, %1, %cst {dimension_numbers = #tpu.dot_dimension_numbers<[1], [0], [0], [1], [0, 0, 1, 1], [], []>} : vector<8x24xf32>, vector<24x128xf32>, vector<8x128xf32> -> vector<8x128xf32>
    %c0_3 = arith.constant 0 : index
    %c0_4 = arith.constant 0 : index
    %3 = vector.load %arg3[%c0_3, %c0_4] : memref<1x128xf32, #tpu.memory_space<vmem>>, vector<1x128xf32>
    %4 = vector.broadcast %3 : vector<1x128xf32> to vector<8x128xf32>
    %5 = arith.addf %2, %4 : vector<8x128xf32>
    %cst_5 = arith.constant 0.000000e+00 : f32
    %6 = vector.broadcast %cst_5 : f32 to vector<8x128xf32>
    %7 = arith.maximumf %5, %6 : vector<8x128xf32>
    %c0_6 = arith.constant 0 : index
    %c0_7 = arith.constant 0 : index
    %8 = vector.load %arg4[%c0_6, %c0_7] : memref<8x128xf32, #tpu.memory_space<vmem>>, vector<8x128xf32>
    %cst_8 = arith.constant dense<0.000000e+00> : vector<8x8xf32>
    %9 = tpu.matmul %8, %7, %cst_8 {dimension_numbers = #tpu.dot_dimension_numbers<[1], [1], [0], [0], [0, 0, 1, 0], [], []>} : vector<8x128xf32>, vector<8x128xf32>, vector<8x8xf32> -> vector<8x8xf32>
    %10 = vector.extract_strided_slice %9 {offsets = [0, 0], sizes = [1, 8], strides = [1, 1]} : vector<8x8xf32> to vector<1x8xf32>
    %c0_9 = arith.constant 0 : index
    %c0_10 = arith.constant 0 : index
    %11 = vector.load %arg5[%c0_9, %c0_10] : memref<1x1xf32, #tpu.memory_space<vmem>>, vector<1x1xf32>
    %12 = vector.broadcast %11 : vector<1x1xf32> to vector<1x8xf32>
    %13 = arith.addf %10, %12 : vector<1x8xf32>
    %14 = arith.negf %13 : vector<1x8xf32>
    %15 = math.exp %14 : vector<1x8xf32>
    %cst_11 = arith.constant 1.000000e+00 : f32
    %16 = vector.broadcast %cst_11 : f32 to vector<1x8xf32>
    %17 = arith.addf %16, %15 : vector<1x8xf32>
    %18 = arith.divf %16, %17 : vector<1x8xf32>
    %c0_12 = arith.constant 0 : index
    %c0_13 = arith.constant 0 : index
    %c0_14 = arith.constant 0 : index
    %19 = vector.load %arg6[%c0_12, %c0_13, %c0_14] : memref<1x1x8xf32, #tpu.memory_space<vmem>>, vector<1x1x8xf32>
    %20 = vector.shape_cast %19 : vector<1x1x8xf32> to vector<1x8xf32>
    %21 = vector.shape_cast %18 : vector<1x8xf32> to vector<1x1x8xf32>
    tpu.vector_store %arg6[%c0_12, %c0_13, %c0_14], %21 {strides = array<i32>} : memref<1x1x8xf32, #tpu.memory_space<vmem>>, vector<1x1x8xf32>,
    return
  }
  func.func @transform_0(%arg0: i32) -> (i32, i32) {
    %c0_i32 = arith.constant 0 : i32
    %c0_i32_0 = arith.constant 0 : i32
    return %arg0, %c0_i32 : i32, i32
  }
  func.func @transform_1(%arg0: i32) -> (i32, i32) {
    %c0_i32 = arith.constant 0 : i32
    %c0_i32_0 = arith.constant 0 : i32
    %c0_i32_1 = arith.constant 0 : i32
    return %c0_i32, %c0_i32_0 : i32, i32
  }
  func.func @transform_2(%arg0: i32) -> (i32, i32) {
    %c0_i32 = arith.constant 0 : i32
    %c0_i32_0 = arith.constant 0 : i32
    %c0_i32_1 = arith.constant 0 : i32
    return %c0_i32, %c0_i32_0 : i32, i32
  }
  func.func @transform_3(%arg0: i32) -> (i32, i32) {
    %c0_i32 = arith.constant 0 : i32
    %c0_i32_0 = arith.constant 0 : i32
    %c0_i32_1 = arith.constant 0 : i32
    return %c0_i32, %c0_i32_0 : i32, i32
  }
  func.func @transform_4(%arg0: i32) -> (i32, i32) {
    %c0_i32 = arith.constant 0 : i32
    %c0_i32_0 = arith.constant 0 : i32
    %c0_i32_1 = arith.constant 0 : i32
    return %c0_i32, %c0_i32_0 : i32, i32
  }
  func.func @transform_5(%arg0: i32) -> (i32, i32, i32) {
    %c0_i32 = arith.constant 0 : i32
    %c0_i32_0 = arith.constant 0 : i32
    %c0_i32_1 = arith.constant 0 : i32
    return %arg0, %c0_i32, %c0_i32_0 : i32, i32, i32
  }
}

</mosaic_0001>

<llo_original>
// kernel: lm_model_forward.1
$region0: #{lm_model_forward.1}
  #allocation0 [shape = 'u32[]', space=smem, size = 0x4, offset = 0x4, fixed_abs, tag = 'smem constant byte address 0x4 - core index']
  #allocation1 [shape = 'u32[144,128]{1,0:T(1,128)}', space=vmem, size = 0x12000, scoped, tag = 'internal scratch']
  #allocation2 [shape = 'f32[1,1]{1,0:T(1,128)S(1)}', space=vmem, size = 0x200, scoped, tag = 'scoped memory for lm_model_forward.1']
  %s0 = inlined_call_operand.vmem [shape: f32[8,24], index: 0, kind: input, shape index: {}]
  %s1 = inlined_call_operand.vmem [shape: f32[24,128], index: 1, kind: input, shape index: {}]
  %s2 = inlined_call_operand.vmem [shape: f32[1,128], index: 2, kind: input, shape index: {}]
  %s3 = inlined_call_operand.vmem [shape: f32[8,128], index: 3, kind: input, shape index: {}]
  %s4 = inlined_call_operand.<no memory space> [shape: f32[1,1], index: 4, kind: input, shape index: {}]
  %s5 = inlined_call_operand.hbm [shape: f32[1,1,8], index: 5, kind: output, shape index: {}]
  %s6 = sld [smem:[#allocation0]]
  $region30: #{lm_model_forward.1} parent=0
    _
  %s8 = ssub.s32 1, %s6
  %s9 = scalar_select 0, %s8, %s6
  %v10 = vstv %s4
  %11 = vst [vmem:[#allocation2] sm:$0x1] %v10
  $region1: #{lm_model_forward.1} parent=0
    #allocation3 [shape = 'u8[512]{0}', space=vmem, size = 0x400, scoped, tag = 'output window, operand 0, single buffered']
    #allocation4 [shape = 's32[1]{0}', space=sflag, size = 0x4, scoped, tag = 'scoped memory for lm_model_forward.1']
    %12 = vsyncpa [#allocation4], 0
    // Predicated region
    $region2: #{lm_model_forward.1} parent=1 // pred_check
      _
    $region3: #{lm_model_forward.1} parent=1 // pred_check_branch
      %14 = sbr.rel (0) target = $region5
    $region4: #{lm_model_forward.1} parent=1 // pred_region
      _
    $region5: #{lm_model_forward.1} parent=1 // pred_fallthru
      _
    // Predicated region
    $region6: #{lm_model_forward.1} parent=1 // pred_check
      _
    $region7: #{lm_model_forward.1} parent=1 // pred_check_branch
      %16 = sbr.rel (0) target = $region9
    $region8: #{lm_model_forward.1} parent=1 // pred_region
      _
    $region9: #{lm_model_forward.1} parent=1 // pred_fallthru
      _
    // Predicated region
    $region10: #{lm_model_forward.1} parent=1 // pred_check
      _
    $region11: #{lm_model_forward.1} parent=1 // pred_check_branch
      %18 = sbr.rel (0) target = $region13
    $region12: #{lm_model_forward.1} parent=1 // pred_region
      _
    $region13: #{lm_model_forward.1} parent=1 // pred_fallthru
      _
    // Predicated region
    $region14: #{lm_model_forward.1} parent=1 // pred_check
      _
    $region15: #{lm_model_forward.1} parent=1 // pred_check_branch
      %20 = sbr.rel (0) target = $region17
    $region16: #{lm_model_forward.1} parent=1 // pred_region
      _
    $region17: #{lm_model_forward.1} parent=1 // pred_fallthru
      _
    // Predicated region
    $region18: #{lm_model_forward.1} parent=1 // pred_check
      _
    $region19: #{lm_model_forward.1} parent=1 // pred_check_branch
      %22 = sbr.rel (0) target = $region21
    $region20: #{lm_model_forward.1} parent=1 // pred_region
      _
    $region21: #{lm_model_forward.1} parent=1 // pred_fallthru
      _
    %v23 = vld [vmem:[%s0] sm:$0xff]
    %v24 = vld [vmem:[%s1] sm:$0xff]
    %v25 = vld [vmem:[%s1 + $0x8] sm:$0xff]
    %v26 = vld [vmem:[%s1 + $0x10] sm:$0xff]
    %v27 = vld [vmem:[%s2] sm:$0x1]
    %v29 = vlaneseq
    %v30 = vshrl.u32 %v29, 7
    %v31 = vsub.s32 0, %v30
    %v32 = vrot.slane %v27, %v31
    %vm34 = vcmask 195584
    %v36 = vsel %vm34, %v23, 0
    %38 = vmatprep.subr.mxu0 0.0
    %39 = vmatpush1.msra.mxu0 %v24
    %40 = vmatprep.subr.mxu0 0.0
    %41 = vmatpush1.msra.mxu0 %v25
    %42 = vmatprep.subr.mxu0 0.0
    %43 = vmatpush1.msra.mxu0 %v26
    %44 = vmatprep.subr.mxu0 0.0
    %45 = vmatpush1.msra.mxu0 0.0
    %46 = vmatprep.subr.mxu0 0.0
    %47 = vmatpush1.msra.mxu0 0.0
    %48 = vmatprep.subr.mxu0 0.0
    %49 = vmatpush1.msra.mxu0 0.0
    %50 = vmatprep.subr.mxu0 0.0
    %51 = vmatpush1.msra.mxu0 0.0
    %52 = vmatprep.subr.mxu0 0.0
    %53 = vmatpush1.msra.mxu0 0.0
    %54 = vmatprep.subr.mxu0 0.0
    %55 = vmatpush1.msra.mxu0 0.0
    %56 = vmatprep.subr.mxu0 0.0
    %57 = vmatpush1.msra.mxu0 0.0
    %58 = vmatprep.subr.mxu0 0.0
    %59 = vmatpush1.msra.mxu0 0.0
    %60 = vmatprep.subr.mxu0 0.0
    %61 = vmatpush1.msra.mxu0 0.0
    %62 = vmatprep.subr.mxu0 0.0
    %63 = vmatpush1.msra.mxu0 0.0
    %64 = vmatprep.subr.mxu0 0.0
    %65 = vmatpush1.msra.mxu0 0.0
    %66 = vmatprep.subr.mxu0 0.0
    %67 = vmatpush1.msra.mxu0 0.0
    %68 = vmatprep.subr.mxu0 0.0
    %69 = vmatpush1.msra.mxu0 0.0
    %70 = vmatprep.subr.mxu0 0.0
    %71 = vmatpush1.msra.mxu0 0.0
    %72 = vmatprep.subr.mxu0 0.0
    %73 = vmatpush1.msra.mxu0 0.0
    %74 = vmatprep.subr.mxu0 0.0
    %75 = vmatpush1.msra.mxu0 0.0
    %76 = vmatprep.subr.mxu0 0.0
    %77 = vmatpush1.msra.mxu0 0.0
    %78 = vmatprep.subr.mxu0 0.0
    %79 = vmatpush1.msra.mxu0 0.0
    %80 = vmatprep.subr.mxu0 0.0
    %81 = vmatpush1.msra.mxu0 0.0
    %82 = vmatprep.subr.mxu0 0.0
    %83 = vmatpush1.msra.mxu0 0.0
    %84 = vmatprep.subr.mxu0 0.0
    %85 = vmatpush1.msra.mxu0 0.0
    %86 = vmatprep.subr.mxu0 0.0
    %87 = vmatpush1.msra.mxu0 0.0
    %88 = vmatprep.subr.mxu0 0.0
    %89 = vmatpush1.msra.mxu0 0.0
    %90 = vmatprep.subr.mxu0 0.0
    %91 = vmatpush1.msra.mxu0 0.0
    %92 = vmatprep.subr.mxu0 0.0
    %93 = vmatpush1.msra.mxu0 0.0
    %94 = vmatprep.subr.mxu0 0.0
    %95 = vmatpush1.msra.mxu0 0.0
    %96 = vmatprep.subr.mxu0 0.0
    %97 = vmatpush1.msra.mxu0 0.0
    %98 = vmatprep.subr.mxu0 0.0
    %99 = vmatpush1.msra.mxu0 0.0
    %100 = vmatprep.subr.mxu0 0.0
    %101 = vmatpush1.msra.mxu0 0.0
    %102 = vmatprep.mubr.f32.mxu0 0.0
    %103 = vmatmul.mubr.f32.gmra.mrb[0].mxu0 %v36
    %v104 = vpop.f32.mrb[0].mxu0
    %v105 = vadd.f32 %v32, %v104
    %v106 = vpop.f32.mrb[0].mxu0
    %107 = vdwg.mxu0
    %v108 = vmax.f32 %v105, 0.0
    %v109 = vld [vmem:[%s3] sm:$0xff]
    %110 = vmatprep.subr.mxu0 0.0
    %111 = vmatpush1.xpose.msra.mxu0 %v108
    %112 = vmatprep.subr.mxu0 0.0
    %113 = vmatpush1.xpose.msra.mxu0 0.0
    %114 = vmatprep.subr.mxu0 0.0
    %115 = vmatpush1.xpose.msra.mxu0 0.0
    %116 = vmatprep.subr.mxu0 0.0
    %117 = vmatpush1.xpose.msra.mxu0 0.0
    %118 = vmatprep.subr.mxu0 0.0
    %119 = vmatpush1.xpose.msra.mxu0 0.0
    %120 = vmatprep.subr.mxu0 0.0
    %121 = vmatpush1.xpose.msra.mxu0 0.0
    %122 = vmatprep.subr.mxu0 0.0
    %123 = vmatpush1.xpose.msra.mxu0 0.0
    %124 = vmatprep.subr.mxu0 0.0
    %125 = vmatpush1.xpose.msra.mxu0 0.0
    %126 = vmatprep.subr.mxu0 0.0
    %127 = vmatpush1.xpose.msra.mxu0 0.0
    %128 = vmatprep.subr.mxu0 0.0
    %129 = vmatpush1.xpose.msra.mxu0 0.0
    %130 = vmatprep.subr.mxu0 0.0
    %131 = vmatpush1.xpose.msra.mxu0 0.0
    %132 = vmatprep.subr.mxu0 0.0
    %133 = vmatpush1.xpose.msra.mxu0 0.0
    %134 = vmatprep.subr.mxu0 0.0
    %135 = vmatpush1.xpose.msra.mxu0 0.0
    %136 = vmatprep.subr.mxu0 0.0
    %137 = vmatpush1.xpose.msra.mxu0 0.0
    %138 = vmatprep.subr.mxu0 0.0
    %139 = vmatpush1.xpose.msra.mxu0 0.0
    %140 = vmatprep.subr.mxu0 0.0
    %141 = vmatpush1.xpose.msra.mxu0 0.0
    %142 = vmatprep.subr.mxu0 0.0
    %143 = vmatpush1.xpose.msra.mxu0 0.0
    %144 = vmatprep.subr.mxu0 0.0
    %145 = vmatpush1.xpose.msra.mxu0 0.0
    %146 = vmatprep.subr.mxu0 0.0
    %147 = vmatpush1.xpose.msra.mxu0 0.0
    %148 = vmatprep.subr.mxu0 0.0
    %149 = vmatpush1.xpose.msra.mxu0 0.0
    %150 = vmatprep.subr.mxu0 0.0
    %151 = vmatpush1.xpose.msra.mxu0 0.0
    %152 = vmatprep.subr.mxu0 0.0
    %153 = vmatpush1.xpose.msra.mxu0 0.0
    %154 = vmatprep.subr.mxu0 0.0
    %155 = vmatpush1.xpose.msra.mxu0 0.0
    %156 = vmatprep.subr.mxu0 0.0
    %157 = vmatpush1.xpose.msra.mxu0 0.0
    %158 = vmatprep.subr.mxu0 0.0
    %159 = vmatpush1.xpose.msra.mxu0 0.0
    %160 = vmatprep.subr.mxu0 0.0
    %161 = vmatpush1.xpose.msra.mxu0 0.0
    %162 = vmatprep.subr.mxu0 0.0
    %163 = vmatpush1.xpose.msra.mxu0 0.0
    %164 = vmatprep.subr.mxu0 0.0
    %165 = vmatpush1.xpose.msra.mxu0 0.0
    %166 = vmatprep.subr.mxu0 0.0
    %167 = vmatpush1.xpose.msra.mxu0 0.0
    %168 = vmatprep.subr.mxu0 0.0
    %169 = vmatpush1.xpose.msra.mxu0 0.0
    %170 = vmatprep.subr.mxu0 0.0
    %171 = vmatpush1.xpose.msra.mxu0 0.0
    %172 = vmatprep.subr.mxu0 0.0
    %173 = vmatpush1.xpose.msra.mxu0 0.0
    %174 = vmatprep.mubr.f32.mxu0 0.0
    %175 = vmatmul.mubr.f32.gmra.mrb[0].mxu0 %v109
    %v176 = vpop.f32.mrb[0].mxu0
    %v177 = vadd.f32 0.0, %v176
    %v178 = vpop.f32.mrb[0].mxu0
    %179 = vdwg.mxu0
    %v180 = vld [vmem:[#allocation2] sm:$0x1]
    %182 = vset.pattern.permute.xlu0 0
    %183 = vperm.xlu0 %182, %v180
    %v184 = vpop.permute.xlu0 %183
    %v186 = vlaneseq
    %v187 = vshrl.u32 %v186, 7
    %v188 = vsub.s32 0, %v187
    %v189 = vrot.slane %v184, %v188
    %v190 = vadd.f32 %v177, %v189
    %v191 = vxor.u32 %v190, 2147483648
    %v192 = vmul.f32 %v191, 1.442695
    %v193 = vpow.pop %v192
    %v194 = vadd.f32 %v193, 1.0
    %v195 = vrcp.pop %v194
    %v196 = vmul.f32 1.0, %v195
    %vm197 = vcmask 57344
    %198 = vst.msk [vmem:[#allocation3] sm:$0x1] %vm197, %v196
    // Predicated region
    $region22: #{lm_model_forward.1} parent=1 // pred_check
      _
    $region23: #{lm_model_forward.1} parent=1 // pred_check_branch
      %200 = sbr.rel (0) target = $region25
    $region24: #{lm_model_forward.1} parent=1 // pred_region
      %s202 = ssub.s32 16, 16
      %203 = vsyncadd [#allocation4], %s202
      %s205 = sshll.u32 [#allocation3], 4
      %s206 = int_to_ptr.vmem [resolvable:$true] %s205
      %208 = dma.vmem_to_hbm [thread:$0]  %s206, 16, %s5, [#allocation4]
    $region25: #{lm_model_forward.1} parent=1 // pred_fallthru
      _
    // Predicated region
    $region26: #{lm_model_forward.1} parent=1 // pred_check
      _
    $region27: #{lm_model_forward.1} parent=1 // pred_check_branch
      %210 = sbr.rel (0) target = $region29
    $region28: #{lm_model_forward.1} parent=1 // pred_region
      %211 = dma.done [#allocation4], 16
    $region29: #{lm_model_forward.1} parent=1 // pred_fallthru
      _
    %212 = vsyncpa [#allocation4], 1

</llo_original>
